<compile_context>
chip_gen: v7x
topology: tpu7x:2x2x1
jax: 0.10.0
libtpu: 0.0.40
codegen_flags: <defaults>
</compile_context>

<pallas_src>
import jax
import jax.numpy as jnp
from jax.experimental import pallas as pl
from jax.experimental.pallas import tpu as pltpu

SPACE_SIZE = 2    # MountainCarContinuous observation dim
ACTION_SPACE = 1  # MountainCarContinuous action dim
HIDDEN = 4

# Flat parameter layout in SMEM (18 f32 scalars):
#   [0:8)   w1, row-major  -> w1[i, j] at index i*HIDDEN + j
#   [8:12)  b1
#   [12:16) w2_hidden (w2[:4, 0])
#   [16]    w2_action (w2[4, 0])
#   [17]    b2
_W1_OFF = 0
_B1_OFF = 8
_W2H_OFF = 12
_W2A_OFF = 16
_B2_OFF = 17


def critic_kernel(params_ref, sa_ref, out_ref):
    # sa_ref: [3, TB]  rows = (state0, state1, action), batch on lanes.
    s0 = sa_ref[0:1, :]
    s1 = sa_ref[1:2, :]
    a = sa_ref[2:3, :]

    # z = b2 + action * w2_a  (scalar broadcasts over the lane-dense row)
    z = a * params_ref[_W2A_OFF] + params_ref[_B2_OFF]

    # Unrolled hidden units: pure VPU multiply-adds, no MXU.
    for j in range(HIDDEN):
        h_j = s0 * params_ref[_W1_OFF + j] \
            + s1 * params_ref[_W1_OFF + HIDDEN + j] \
            + params_ref[_B1_OFF + j]
        h_j = jnp.maximum(h_j, 0.0)                    # ReLU
        z = z + h_j * params_ref[_W2H_OFF + j]

    out_ref[...] = jnp.tanh(z).astype(out_ref.dtype)   # tanh -> EUP


def _round_up(x, m):
    return pl.cdiv(x, m) * m


def critic_forward(state, action, w1, b1, w2, b2, *, block_b=1024):
    """state: [B, SPACE_SIZE], action: [B, ACTION_SPACE] -> [B, 1] (float32)."""
    B = state.shape[0]

    # Layout plumbing in plain JAX (not in the kernel):
    #   pack state+action -> [3, B] with batch on the lane axis,
    #   flatten all parameters -> one [18] f32 array for SMEM.
    sa = jnp.concatenate([state, action], axis=1).T.astype(jnp.float32)   # [3, B]
    params = jnp.concatenate([
        w1.reshape(-1),          # 8
        b1.reshape(-1),          # 4
        w2[:HIDDEN, 0],          # 4
        w2[HIDDEN:, 0],          # 1
        b2.reshape(-1),          # 1
    ]).astype(jnp.float32)       # [18]

    # Lane-dense batch tile: multiple of 128, capped at block_b.
    tb = min(block_b, _round_up(B, 128))
    Bp = _round_up(B, tb)
    if Bp != B:
        sa = jnp.pad(sa, ((0, 0), (0, Bp - B)))

    out = pl.pallas_call(
        critic_kernel,
        out_shape=jax.ShapeDtypeStruct((1, Bp), jnp.float32),
        grid=(Bp // tb,),
        in_specs=[
            # All 18 scalars in one SMEM ref (single tiny DMA, scalar reads).
            pl.BlockSpec(memory_space=pltpu.MemorySpace.SMEM),
            # Packed inputs: full feature dim, lane-dense batch tile.
            pl.BlockSpec((3, tb), lambda i: (0, i)),
        ],
        out_specs=pl.BlockSpec((1, tb), lambda i: (0, i)),
        compiler_params=pltpu.CompilerParams(
            dimension_semantics=("parallel",)),
    )(params, sa)

    return out[:, :B].T   # [B, 1]


def reference_forward(state, action, w1, b1, w2, b2):
    h = jnp.maximum(state @ w1 + b1, 0.0)
    z = jnp.concatenate([h, action], axis=1)
    return jnp.tanh(z @ w2 + b2)


if __name__ == "__main__":
    key = jax.random.PRNGKey(0)
    k_state, k_action, k_w1, k_b1, k_w2, k_b2 = jax.random.split(key, 6)

    B = 8  # small batch
    state = jax.random.normal(k_state, (B, SPACE_SIZE), dtype=jnp.float32)
    action = jax.random.normal(k_action, (B, ACTION_SPACE), dtype=jnp.float32)

    # Deterministic synthetic parameters (torch Linear shapes, stored as [in, out]).
    w1 = jax.random.normal(k_w1, (SPACE_SIZE, HIDDEN), dtype=jnp.float32) * 0.5
    b1 = jax.random.normal(k_b1, (HIDDEN,), dtype=jnp.float32) * 0.1
    w2 = jax.random.normal(k_w2, (HIDDEN + ACTION_SPACE, 1), dtype=jnp.float32) * 0.5
    b2 = jax.random.normal(k_b2, (1,), dtype=jnp.float32) * 0.1

    out = critic_forward(state, action, w1, b1, w2, b2)
    out = jax.block_until_ready(out)

    ref = reference_forward(state, action, w1, b1, w2, b2)
    assert out.shape == (B, 1)
    assert jnp.allclose(out, ref, atol=1e-5, rtol=1e-5), "mismatch vs reference"

    print("KERNEL_OK")
</pallas_src>

<mosaic_0001>
module attributes {stable_mosaic.version = 11 : i64} {
  func.func @critic_kernel(%arg0: i32, %arg1: memref<18xf32, #tpu.memory_space<smem>>, %arg2: memref<3x128xf32, #tpu.memory_space<vmem>>, %arg3: memref<1x128xf32, #tpu.memory_space<vmem>>) attributes {dimension_semantics = [#tpu.dimension_semantics<parallel>], iteration_bounds = array<i64: 1>, scalar_prefetch = 0 : i64, scratch_operands = 0 : i64, tpu.core_type = #tpu.core_type<tc>, window_params = [{transform_indices = @transform_0, window_bounds = array<i64: 18>}, {transform_indices = @transform_1, window_bounds = array<i64: 3, 128>}, {transform_indices = @transform_2, window_bounds = array<i64: 1, 128>}]} {
    %c0 = arith.constant 0 : index
    %c0_0 = arith.constant 0 : index
    %0 = vector.load %arg2[%c0, %c0_0] : memref<3x128xf32, #tpu.memory_space<vmem>>, vector<1x128xf32>
    %c1 = arith.constant 1 : index
    %c0_1 = arith.constant 0 : index
    %1 = vector.load %arg2[%c1, %c0_1] : memref<3x128xf32, #tpu.memory_space<vmem>>, vector<1x128xf32>
    %c2 = arith.constant 2 : index
    %c0_2 = arith.constant 0 : index
    %2 = vector.load %arg2[%c2, %c0_2] : memref<3x128xf32, #tpu.memory_space<vmem>>, vector<1x128xf32>
    %c16 = arith.constant 16 : index
    %3 = memref.load %arg1[%c16] : memref<18xf32, #tpu.memory_space<smem>>
    %4 = vector.broadcast %3 : f32 to vector<1x128xf32>
    %5 = arith.mulf %2, %4 : vector<1x128xf32>
    %c17 = arith.constant 17 : index
    %6 = memref.load %arg1[%c17] : memref<18xf32, #tpu.memory_space<smem>>
    %7 = vector.broadcast %6 : f32 to vector<1x128xf32>
    %8 = arith.addf %5, %7 : vector<1x128xf32>
    %c0_3 = arith.constant 0 : index
    %9 = memref.load %arg1[%c0_3] : memref<18xf32, #tpu.memory_space<smem>>
    %10 = vector.broadcast %9 : f32 to vector<1x128xf32>
    %11 = arith.mulf %0, %10 : vector<1x128xf32>
    %c4 = arith.constant 4 : index
    %12 = memref.load %arg1[%c4] : memref<18xf32, #tpu.memory_space<smem>>
    %13 = vector.broadcast %12 : f32 to vector<1x128xf32>
    %14 = arith.mulf %1, %13 : vector<1x128xf32>
    %15 = arith.addf %11, %14 : vector<1x128xf32>
    %c8 = arith.constant 8 : index
    %16 = memref.load %arg1[%c8] : memref<18xf32, #tpu.memory_space<smem>>
    %17 = vector.broadcast %16 : f32 to vector<1x128xf32>
    %18 = arith.addf %15, %17 : vector<1x128xf32>
    %cst = arith.constant 0.000000e+00 : f32
    %19 = vector.broadcast %cst : f32 to vector<1x128xf32>
    %20 = arith.maximumf %18, %19 : vector<1x128xf32>
    %c12 = arith.constant 12 : index
    %21 = memref.load %arg1[%c12] : memref<18xf32, #tpu.memory_space<smem>>
    %22 = vector.broadcast %21 : f32 to vector<1x128xf32>
    %23 = arith.mulf %20, %22 : vector<1x128xf32>
    %24 = arith.addf %8, %23 : vector<1x128xf32>
    %c1_4 = arith.constant 1 : index
    %25 = memref.load %arg1[%c1_4] : memref<18xf32, #tpu.memory_space<smem>>
    %26 = vector.broadcast %25 : f32 to vector<1x128xf32>
    %27 = arith.mulf %0, %26 : vector<1x128xf32>
    %c5 = arith.constant 5 : index
    %28 = memref.load %arg1[%c5] : memref<18xf32, #tpu.memory_space<smem>>
    %29 = vector.broadcast %28 : f32 to vector<1x128xf32>
    %30 = arith.mulf %1, %29 : vector<1x128xf32>
    %31 = arith.addf %27, %30 : vector<1x128xf32>
    %c9 = arith.constant 9 : index
    %32 = memref.load %arg1[%c9] : memref<18xf32, #tpu.memory_space<smem>>
    %33 = vector.broadcast %32 : f32 to vector<1x128xf32>
    %34 = arith.addf %31, %33 : vector<1x128xf32>
    %cst_5 = arith.constant 0.000000e+00 : f32
    %35 = vector.broadcast %cst_5 : f32 to vector<1x128xf32>
    %36 = arith.maximumf %34, %35 : vector<1x128xf32>
    %c13 = arith.constant 13 : index
    %37 = memref.load %arg1[%c13] : memref<18xf32, #tpu.memory_space<smem>>
    %38 = vector.broadcast %37 : f32 to vector<1x128xf32>
    %39 = arith.mulf %36, %38 : vector<1x128xf32>
    %40 = arith.addf %24, %39 : vector<1x128xf32>
    %c2_6 = arith.constant 2 : index
    %41 = memref.load %arg1[%c2_6] : memref<18xf32, #tpu.memory_space<smem>>
    %42 = vector.broadcast %41 : f32 to vector<1x128xf32>
    %43 = arith.mulf %0, %42 : vector<1x128xf32>
    %c6 = arith.constant 6 : index
    %44 = memref.load %arg1[%c6] : memref<18xf32, #tpu.memory_space<smem>>
    %45 = vector.broadcast %44 : f32 to vector<1x128xf32>
    %46 = arith.mulf %1, %45 : vector<1x128xf32>
    %47 = arith.addf %43, %46 : vector<1x128xf32>
    %c10 = arith.constant 10 : index
    %48 = memref.load %arg1[%c10] : memref<18xf32, #tpu.memory_space<smem>>
    %49 = vector.broadcast %48 : f32 to vector<1x128xf32>
    %50 = arith.addf %47, %49 : vector<1x128xf32>
    %cst_7 = arith.constant 0.000000e+00 : f32
    %51 = vector.broadcast %cst_7 : f32 to vector<1x128xf32>
    %52 = arith.maximumf %50, %51 : vector<1x128xf32>
    %c14 = arith.constant 14 : index
    %53 = memref.load %arg1[%c14] : memref<18xf32, #tpu.memory_space<smem>>
    %54 = vector.broadcast %53 : f32 to vector<1x128xf32>
    %55 = arith.mulf %52, %54 : vector<1x128xf32>
    %56 = arith.addf %40, %55 : vector<1x128xf32>
    %c3 = arith.constant 3 : index
    %57 = memref.load %arg1[%c3] : memref<18xf32, #tpu.memory_space<smem>>
    %58 = vector.broadcast %57 : f32 to vector<1x128xf32>
    %59 = arith.mulf %0, %58 : vector<1x128xf32>
    %c7 = arith.constant 7 : index
    %60 = memref.load %arg1[%c7] : memref<18xf32, #tpu.memory_space<smem>>
    %61 = vector.broadcast %60 : f32 to vector<1x128xf32>
    %62 = arith.mulf %1, %61 : vector<1x128xf32>
    %63 = arith.addf %59, %62 : vector<1x128xf32>
    %c11 = arith.constant 11 : index
    %64 = memref.load %arg1[%c11] : memref<18xf32, #tpu.memory_space<smem>>
    %65 = vector.broadcast %64 : f32 to vector<1x128xf32>
    %66 = arith.addf %63, %65 : vector<1x128xf32>
    %cst_8 = arith.constant 0.000000e+00 : f32
    %67 = vector.broadcast %cst_8 : f32 to vector<1x128xf32>
    %68 = arith.maximumf %66, %67 : vector<1x128xf32>
    %c15 = arith.constant 15 : index
    %69 = memref.load %arg1[%c15] : memref<18xf32, #tpu.memory_space<smem>>
    %70 = vector.broadcast %69 : f32 to vector<1x128xf32>
    %71 = arith.mulf %68, %70 : vector<1x128xf32>
    %72 = arith.addf %56, %71 : vector<1x128xf32>
    %73 = math.tanh %72 : vector<1x128xf32>
    %c0_9 = arith.constant 0 : index
    %c0_10 = arith.constant 0 : index
    %74 = vector.load %arg3[%c0_9, %c0_10] : memref<1x128xf32, #tpu.memory_space<vmem>>, vector<1x128xf32>
    tpu.vector_store %arg3[%c0_9, %c0_10], %73 {strides = array<i32>} : memref<1x128xf32, #tpu.memory_space<vmem>>, vector<1x128xf32>,
    return
  }
  func.func @transform_0(%arg0: i32) -> i32 {
    %c0_i32 = arith.constant 0 : i32
    %c0_i32_0 = arith.constant 0 : i32
    return %c0_i32 : i32
  }
  func.func @transform_1(%arg0: i32) -> (i32, i32) {
    %c0_i32 = arith.constant 0 : i32
    %c0_i32_0 = arith.constant 0 : i32
    return %c0_i32, %arg0 : i32, i32
  }
  func.func @transform_2(%arg0: i32) -> (i32, i32) {
    %c0_i32 = arith.constant 0 : i32
    %c0_i32_0 = arith.constant 0 : i32
    return %c0_i32, %arg0 : i32, i32
  }
}

</mosaic_0001>

<llo_original>
// kernel: tpu_custom_call.1
$region0: #{tpu_custom_call.1}
  #allocation0 [shape = 'u32[]', space=smem, size = 0x4, offset = 0x4, fixed_abs, tag = 'smem constant byte address 0x4 - core index']
  #allocation1 [shape = 'u32[144,128]{1,0:T(1,128)}', space=vmem, size = 0x12000, scoped, tag = 'internal scratch']
  %s0 = inlined_call_operand.hbm [shape: f32[18], index: 0, kind: input, shape index: {}]
  %s1 = inlined_call_operand.hbm [shape: f32[3,128], index: 1, kind: input, shape index: {}]
  %s2 = inlined_call_operand.hbm [shape: f32[1,128], index: 2, kind: output, shape index: {}]
  %s3 = sld [smem:[#allocation0]]
  $region26: #{tpu_custom_call.1} parent=0
    _
  %s5 = ssub.s32 1, %s3
  %s6 = scalar_select 0, %s5, %s3
  $region1: #{tpu_custom_call.1} parent=0
    #allocation2 [shape = 'u8[512]{0}', space=smem, size = 0x200, scoped, tag = 'input window, operand 0, single buffered']
    #allocation3 [shape = 's32[1]{0}', space=sflag, size = 0x4, scoped, tag = 'scoped memory for tpu_custom_call.1']
    #allocation4 [shape = 's32[1]{0}', space=sflag, size = 0x4, scoped, tag = 'scoped memory for tpu_custom_call.1']
    #allocation5 [shape = 's32[1]{0}', space=sflag, size = 0x4, scoped, tag = 'scoped memory for tpu_custom_call.1']
    #allocation6 [shape = 'u8[2048]{0}', space=vmem, size = 0x800, scoped, tag = 'input window, operand 1, single buffered']
    #allocation7 [shape = 'u8[512]{0}', space=vmem, size = 0x400, scoped, tag = 'output window, operand 0, single buffered']
    %7 = vsyncpa [#allocation5], 0
    %8 = vsyncpa [#allocation3], 0
    %9 = vsyncpa [#allocation4], 0
    // Predicated region
    $region2: #{tpu_custom_call.1} parent=1 // pred_check
      _
    $region3: #{tpu_custom_call.1} parent=1 // pred_check_branch
      %11 = sbr.rel (0) target = $region5
    $region4: #{tpu_custom_call.1} parent=1 // pred_region
      %s13 = ssub.s32 16, 16
      %14 = vsyncadd [#allocation5], %s13
      %17 = dma.hbm_to_smem %s0, 16, [#allocation2], [#allocation5]
    $region5: #{tpu_custom_call.1} parent=1 // pred_fallthru
      _
    // Predicated region
    $region6: #{tpu_custom_call.1} parent=1 // pred_check
      _
    $region7: #{tpu_custom_call.1} parent=1 // pred_check_branch
      %19 = sbr.rel (0) target = $region9
    $region8: #{tpu_custom_call.1} parent=1 // pred_region
      %s21 = ssub.s32 64, 64
      %22 = vsyncadd [#allocation3], %s21
      %s24 = sshll.u32 [#allocation6], 4
      %s25 = int_to_ptr.vmem [resolvable:$true] %s24
      %27 = dma.hbm_to_vmem [thread:$0]  %s1, 64, %s25, [#allocation3]
    $region9: #{tpu_custom_call.1} parent=1 // pred_fallthru
      _
    // Predicated region
    $region10: #{tpu_custom_call.1} parent=1 // pred_check
      _
    $region11: #{tpu_custom_call.1} parent=1 // pred_check_branch
      %29 = sbr.rel (0) target = $region13
    $region12: #{tpu_custom_call.1} parent=1 // pred_region
      %30 = dma.done [#allocation5], 16
    $region13: #{tpu_custom_call.1} parent=1 // pred_fallthru
      _
    // Predicated region
    $region14: #{tpu_custom_call.1} parent=1 // pred_check
      _
    $region15: #{tpu_custom_call.1} parent=1 // pred_check_branch
      %32 = sbr.rel (0) target = $region17
    $region16: #{tpu_custom_call.1} parent=1 // pred_region
      %33 = dma.done [#allocation3], 64
    $region17: #{tpu_custom_call.1} parent=1 // pred_fallthru
      _
    %34 = sfence
    %v35 = vld [vmem:[#allocation6] sm:$0x1]
    %v36 = vld [vmem:[#allocation6 + $0x1] sm:$0x1]
    %v37 = vld [vmem:[#allocation6 + $0x2] sm:$0x1]
    %s38 = sld [smem:[#allocation2 + $0x10]]
    %v39 = vstv %s38
    %v40 = vmul.f32 %v37, %v39
    %s41 = sld [smem:[#allocation2 + $0x11]]
    %v42 = vstv %s41
    %v43 = vadd.f32 %v40, %v42
    %s44 = sld [smem:[#allocation2]]
    %v45 = vstv %s44
    %v46 = vmul.f32 %v35, %v45
    %s47 = sld [smem:[#allocation2 + $0x4]]
    %v48 = vstv %s47
    %v49 = vmul.f32 %v36, %v48
    %v50 = vadd.f32 %v46, %v49
    %s51 = sld [smem:[#allocation2 + $0x8]]
    %v52 = vstv %s51
    %v53 = vadd.f32 %v50, %v52
    %v54 = vmax.f32 %v53, 0.0
    %s55 = sld [smem:[#allocation2 + $0xc]]
    %v56 = vstv %s55
    %v57 = vmul.f32 %v54, %v56
    %v58 = vadd.f32 %v43, %v57
    %s59 = sld [smem:[#allocation2 + $0x1]]
    %v60 = vstv %s59
    %v61 = vmul.f32 %v35, %v60
    %s62 = sld [smem:[#allocation2 + $0x5]]
    %v63 = vstv %s62
    %v64 = vmul.f32 %v36, %v63
    %v65 = vadd.f32 %v61, %v64
    %s66 = sld [smem:[#allocation2 + $0x9]]
    %v67 = vstv %s66
    %v68 = vadd.f32 %v65, %v67
    %v69 = vmax.f32 %v68, 0.0
    %s70 = sld [smem:[#allocation2 + $0xd]]
    %v71 = vstv %s70
    %v72 = vmul.f32 %v69, %v71
    %v73 = vadd.f32 %v58, %v72
    %s74 = sld [smem:[#allocation2 + $0x2]]
    %v75 = vstv %s74
    %v76 = vmul.f32 %v35, %v75
    %s77 = sld [smem:[#allocation2 + $0x6]]
    %v78 = vstv %s77
    %v79 = vmul.f32 %v36, %v78
    %v80 = vadd.f32 %v76, %v79
    %s81 = sld [smem:[#allocation2 + $0xa]]
    %v82 = vstv %s81
    %v83 = vadd.f32 %v80, %v82
    %v84 = vmax.f32 %v83, 0.0
    %s85 = sld [smem:[#allocation2 + $0xe]]
    %v86 = vstv %s85
    %v87 = vmul.f32 %v84, %v86
    %v88 = vadd.f32 %v73, %v87
    %s89 = sld [smem:[#allocation2 + $0x3]]
    %v90 = vstv %s89
    %v91 = vmul.f32 %v35, %v90
    %s92 = sld [smem:[#allocation2 + $0x7]]
    %v93 = vstv %s92
    %v94 = vmul.f32 %v36, %v93
    %v95 = vadd.f32 %v91, %v94
    %s96 = sld [smem:[#allocation2 + $0xb]]
    %v97 = vstv %s96
    %v98 = vadd.f32 %v95, %v97
    %v99 = vmax.f32 %v98, 0.0
    %s100 = sld [smem:[#allocation2 + $0xf]]
    %v101 = vstv %s100
    %v102 = vmul.f32 %v99, %v101
    %v103 = vadd.f32 %v88, %v102
    %v104 = vtanh.pop %v103
    %105 = vst [vmem:[#allocation7] sm:$0x1] %v104
    // Predicated region
    $region18: #{tpu_custom_call.1} parent=1 // pred_check
      _
    $region19: #{tpu_custom_call.1} parent=1 // pred_check_branch
      %107 = sbr.rel (0) target = $region21
    $region20: #{tpu_custom_call.1} parent=1 // pred_region
      %s109 = ssub.s32 16, 16
      %110 = vsyncadd [#allocation4], %s109
      %s112 = sshll.u32 [#allocation7], 4
      %s113 = int_to_ptr.vmem [resolvable:$true] %s112
      %115 = dma.vmem_to_hbm [thread:$0]  %s113, 16, %s2, [#allocation4]
    $region21: #{tpu_custom_call.1} parent=1 // pred_fallthru
      _
    // Predicated region
    $region22: #{tpu_custom_call.1} parent=1 // pred_check
      _
    $region23: #{tpu_custom_call.1} parent=1 // pred_check_branch
      %117 = sbr.rel (0) target = $region25
    $region24: #{tpu_custom_call.1} parent=1 // pred_region
      %118 = dma.done [#allocation4], 16
    $region25: #{tpu_custom_call.1} parent=1 // pred_fallthru
      _
    %119 = vsyncpa [#allocation3], 1
    %120 = vsyncpa [#allocation4], 1
    %121 = vsyncpa [#allocation5], 1

</llo_original>
